<compile_context>
chip_gen: v5e
topology: v5e:2x2
jax: 0.10.0
libtpu: 0.0.40
codegen_flags: <defaults>
</compile_context>

<pallas_src>
import jax
import jax.numpy as jnp
from jax.experimental import pallas as pl
from jax.experimental.pallas import tpu as pltpu


def gradient_loss(predict, target, *, target_tile_bytes=1 << 20):
    """Pallas implementation of GradientLoss.forward(predict, target)."""
    assert predict.shape == target.shape
    N, C, H, W = predict.shape
    assert H >= 2 and W >= 2, "gradients need at least 2 pixels per spatial dim"
    nc = N * C
    p = predict.reshape(nc, H, W)
    t = target.reshape(nc, H, W)

    # --- tiling ---------------------------------------------------------
    NSPLIT = 2  # parallel axis: both TensorCores on v7x; harmless on v5e/v6e.
    itemsize = predict.dtype.itemsize
    slice_bytes = H * W * itemsize
    tb = max(1, target_tile_bytes // slice_bytes)      # ~1 MiB input tiles
    # keep double-buffered f32 working tiles well inside scoped VMEM on all gens
    tb = min(tb, max(1, (6 * 1024 * 1024) // (H * W * 4)))
    per_split = pl.cdiv(nc, NSPLIT)
    tb = min(tb, per_split)
    steps = pl.cdiv(per_split, tb)
    padded_nc = NSPLIT * steps * tb
    if padded_nc != nc:
        pad = padded_nc - nc
        p = jnp.concatenate([p, jnp.zeros((pad, H, W), p.dtype)], axis=0)
        t = jnp.concatenate([t, jnp.zeros((pad, H, W), t.dtype)], axis=0)

    # --- kernel ---------------------------------------------------------
    def kernel(p_ref, t_ref, sx_ref, sy_ref):
        j = pl.program_id(1)

        @pl.when(j == 0)
        def _init():
            sx_ref[...] = jnp.zeros_like(sx_ref)
            sy_ref[...] = jnp.zeros_like(sy_ref)

        # d = p - t once; diffing d is identical to diffing p and t separately.
        d = p_ref[...].astype(jnp.float32) - t_ref[...].astype(jnp.float32)
        gx = d[:, 1:, :] - d[:, :-1, :]          # (TB, H-1, W)
        gy = d[:, :, 1:] - d[:, :, :-1]          # (TB, H,   W-1)
        # Reduce only over the batch axis (elementwise VPU adds); the expensive
        # cross-lane reduce to a scalar is deferred to the wrapper.
        sx_ref[...] += jnp.sum(jnp.abs(gx), axis=0)
        sy_ref[...] += jnp.sum(jnp.abs(gy), axis=0)

    cost = pl.CostEstimate(
        flops=7 * nc * H * W,
        transcendentals=0,
        bytes_accessed=2 * nc * H * W * itemsize,
    )

    sx, sy = pl.pallas_call(
        kernel,
        out_shape=(
            jax.ShapeDtypeStruct((NSPLIT, H - 1, W), jnp.float32),
            jax.ShapeDtypeStruct((NSPLIT, H, W - 1), jnp.float32),
        ),
        grid_spec=pltpu.PrefetchScalarGridSpec(
            num_scalar_prefetch=0,
            grid=(NSPLIT, steps),
            in_specs=[
                pl.BlockSpec((tb, H, W), lambda c, j: (c * steps + j, 0, 0)),
                pl.BlockSpec((tb, H, W), lambda c, j: (c * steps + j, 0, 0)),
            ],
            out_specs=(
                # Output blocks are the accumulators: index independent of j
                # -> resident in VMEM across the whole reduction axis.
                pl.BlockSpec((None, H - 1, W), lambda c, j: (c, 0, 0)),
                pl.BlockSpec((None, H, W - 1), lambda c, j: (c, 0, 0)),
            ),
        ),
        compiler_params=pltpu.CompilerParams(
            dimension_semantics=("parallel", "arbitrary"),
        ),
        cost_estimate=cost,
    )(p, t)

    # Final (tiny) reductions + means in the wrapper. Padded zero slices
    # contribute exactly 0, so dividing by the true element counts gives the
    # same result as torch's L1Loss means.
    inv_nx = 1.0 / float(nc * (H - 1) * W)
    inv_ny = 1.0 / float(nc * H * (W - 1))
    return jnp.sum(sx) * inv_nx + jnp.sum(sy) * inv_ny


def gradient_loss_ref(predict, target):
    """Pure-JAX reference matching the PyTorch module exactly."""
    def grad(img):
        gx = img[..., 1:, :] - img[..., :-1, :]
        gy = img[..., 1:] - img[..., :-1]
        return gx, gy

    pgx, pgy = grad(predict)
    tgx, tgy = grad(target)
    return jnp.mean(jnp.abs(pgx - tgx)) + jnp.mean(jnp.abs(pgy - tgy))


if __name__ == "__main__":
    key = jax.random.PRNGKey(0)
    k1, k2 = jax.random.split(key)
    N, C, H, W = 2, 4, 16, 16
    predict = jax.random.normal(k1, (N, C, H, W), dtype=jnp.float32)
    target = jax.random.normal(k2, (N, C, H, W), dtype=jnp.float32)

    loss = jax.block_until_ready(gradient_loss(predict, target))
    ref = jax.block_until_ready(gradient_loss_ref(predict, target))

    assert jnp.allclose(loss, ref, rtol=1e-5, atol=1e-6), (loss, ref)
    print("KERNEL_OK")
</pallas_src>

<mosaic_0001>
module attributes {stable_mosaic.version = 11 : i64} {
  func.func @kernel(%arg0: i32, %arg1: i32, %arg2: memref<4x16x16xf32, #tpu.memory_space<vmem>>, %arg3: memref<4x16x16xf32, #tpu.memory_space<vmem>>, %arg4: memref<1x15x16xf32, #tpu.memory_space<vmem>>, %arg5: memref<1x16x15xf32, #tpu.memory_space<vmem>>) attributes {dimension_semantics = [#tpu.dimension_semantics<parallel>, #tpu.dimension_semantics<arbitrary>], iteration_bounds = array<i64: 2, 1>, scalar_prefetch = 0 : i64, scratch_operands = 0 : i64, tpu.core_type = #tpu.core_type<tc>, window_params = [{transform_indices = @transform_0, window_bounds = array<i64: 4, 16, 16>}, {transform_indices = @transform_1, window_bounds = array<i64: 4, 16, 16>}, {transform_indices = @transform_2, window_bounds = array<i64: 1, 15, 16>}, {transform_indices = @transform_3, window_bounds = array<i64: 1, 16, 15>}]} {
    %c0_i32 = arith.constant 0 : i32
    %0 = arith.cmpi eq, %arg1, %c0_i32 : i32
    %1 = arith.extui %0 : i1 to i32
    %c0_i32_0 = arith.constant 0 : i32
    %2 = arith.cmpi ne, %1, %c0_i32_0 : i32
    scf.if %2 {
      %cst_19 = arith.constant 0.000000e+00 : f32
      %28 = vector.broadcast %cst_19 : f32 to vector<15x16xf32>
      %c0_20 = arith.constant 0 : index
      %c0_21 = arith.constant 0 : index
      %c0_22 = arith.constant 0 : index
      %29 = vector.load %arg4[%c0_20, %c0_21, %c0_22] : memref<1x15x16xf32, #tpu.memory_space<vmem>>, vector<1x15x16xf32>
      %30 = vector.shape_cast %29 : vector<1x15x16xf32> to vector<15x16xf32>
      %31 = vector.shape_cast %28 : vector<15x16xf32> to vector<1x15x16xf32>
      tpu.vector_store %arg4[%c0_20, %c0_21, %c0_22], %31 {strides = array<i32>} : memref<1x15x16xf32, #tpu.memory_space<vmem>>, vector<1x15x16xf32>,
      %cst_23 = arith.constant 0.000000e+00 : f32
      %32 = vector.broadcast %cst_23 : f32 to vector<16x15xf32>
      %c0_24 = arith.constant 0 : index
      %c0_25 = arith.constant 0 : index
      %c0_26 = arith.constant 0 : index
      %33 = vector.load %arg5[%c0_24, %c0_25, %c0_26] : memref<1x16x15xf32, #tpu.memory_space<vmem>>, vector<1x16x15xf32>
      %34 = vector.shape_cast %33 : vector<1x16x15xf32> to vector<16x15xf32>
      %35 = vector.shape_cast %32 : vector<16x15xf32> to vector<1x16x15xf32>
      tpu.vector_store %arg5[%c0_24, %c0_25, %c0_26], %35 {strides = array<i32>} : memref<1x16x15xf32, #tpu.memory_space<vmem>>, vector<1x16x15xf32>,
    } else {
    }
    %c0 = arith.constant 0 : index
    %c0_1 = arith.constant 0 : index
    %c0_2 = arith.constant 0 : index
    %3 = vector.load %arg2[%c0, %c0_1, %c0_2] : memref<4x16x16xf32, #tpu.memory_space<vmem>>, vector<4x16x16xf32>
    %c0_3 = arith.constant 0 : index
    %c0_4 = arith.constant 0 : index
    %c0_5 = arith.constant 0 : index
    %4 = vector.load %arg3[%c0_3, %c0_4, %c0_5] : memref<4x16x16xf32, #tpu.memory_space<vmem>>, vector<4x16x16xf32>
    %5 = arith.subf %3, %4 : vector<4x16x16xf32>
    %6 = vector.extract_strided_slice %5 {offsets = [0, 1, 0], sizes = [4, 15, 16], strides = [1, 1, 1]} : vector<4x16x16xf32> to vector<4x15x16xf32>
    %7 = vector.extract_strided_slice %5 {offsets = [0, 0, 0], sizes = [4, 15, 16], strides = [1, 1, 1]} : vector<4x16x16xf32> to vector<4x15x16xf32>
    %8 = arith.subf %6, %7 : vector<4x15x16xf32>
    %9 = vector.extract_strided_slice %5 {offsets = [0, 0, 1], sizes = [4, 16, 15], strides = [1, 1, 1]} : vector<4x16x16xf32> to vector<4x16x15xf32>
    %10 = vector.extract_strided_slice %5 {offsets = [0, 0, 0], sizes = [4, 16, 15], strides = [1, 1, 1]} : vector<4x16x16xf32> to vector<4x16x15xf32>
    %11 = arith.subf %9, %10 : vector<4x16x15xf32>
    %c0_6 = arith.constant 0 : index
    %c0_7 = arith.constant 0 : index
    %c0_8 = arith.constant 0 : index
    %12 = vector.load %arg4[%c0_6, %c0_7, %c0_8] : memref<1x15x16xf32, #tpu.memory_space<vmem>>, vector<1x15x16xf32>
    %13 = vector.shape_cast %12 : vector<1x15x16xf32> to vector<15x16xf32>
    %14 = math.absf %8 : vector<4x15x16xf32>
    %cst = arith.constant dense<0.000000e+00> : vector<15x16xf32>
    %15 = vector.multi_reduction <add>, %14, %cst [0] : vector<4x15x16xf32> to vector<15x16xf32>
    %16 = arith.addf %13, %15 : vector<15x16xf32>
    %c0_9 = arith.constant 0 : index
    %c0_10 = arith.constant 0 : index
    %c0_11 = arith.constant 0 : index
    %17 = vector.load %arg4[%c0_9, %c0_10, %c0_11] : memref<1x15x16xf32, #tpu.memory_space<vmem>>, vector<1x15x16xf32>
    %18 = vector.shape_cast %17 : vector<1x15x16xf32> to vector<15x16xf32>
    %19 = vector.shape_cast %16 : vector<15x16xf32> to vector<1x15x16xf32>
    tpu.vector_store %arg4[%c0_9, %c0_10, %c0_11], %19 {strides = array<i32>} : memref<1x15x16xf32, #tpu.memory_space<vmem>>, vector<1x15x16xf32>,
    %c0_12 = arith.constant 0 : index
    %c0_13 = arith.constant 0 : index
    %c0_14 = arith.constant 0 : index
    %20 = vector.load %arg5[%c0_12, %c0_13, %c0_14] : memref<1x16x15xf32, #tpu.memory_space<vmem>>, vector<1x16x15xf32>
    %21 = vector.shape_cast %20 : vector<1x16x15xf32> to vector<16x15xf32>
    %22 = math.absf %11 : vector<4x16x15xf32>
    %cst_15 = arith.constant dense<0.000000e+00> : vector<16x15xf32>
    %23 = vector.multi_reduction <add>, %22, %cst_15 [0] : vector<4x16x15xf32> to vector<16x15xf32>
    %24 = arith.addf %21, %23 : vector<16x15xf32>
    %c0_16 = arith.constant 0 : index
    %c0_17 = arith.constant 0 : index
    %c0_18 = arith.constant 0 : index
    %25 = vector.load %arg5[%c0_16, %c0_17, %c0_18] : memref<1x16x15xf32, #tpu.memory_space<vmem>>, vector<1x16x15xf32>
    %26 = vector.shape_cast %25 : vector<1x16x15xf32> to vector<16x15xf32>
    %27 = vector.shape_cast %24 : vector<16x15xf32> to vector<1x16x15xf32>
    tpu.vector_store %arg5[%c0_16, %c0_17, %c0_18], %27 {strides = array<i32>} : memref<1x16x15xf32, #tpu.memory_space<vmem>>, vector<1x16x15xf32>,
    return
  }
  func.func @transform_0(%arg0: i32, %arg1: i32) -> (i32, i32, i32) {
    %c1_i32 = arith.constant 1 : i32
    %0 = arith.muli %arg0, %c1_i32 : i32
    %1 = arith.addi %0, %arg1 : i32
    %c0_i32 = arith.constant 0 : i32
    %c0_i32_0 = arith.constant 0 : i32
    %c0_i32_1 = arith.constant 0 : i32
    return %1, %c0_i32, %c0_i32_0 : i32, i32, i32
  }
  func.func @transform_1(%arg0: i32, %arg1: i32) -> (i32, i32, i32) {
    %c1_i32 = arith.constant 1 : i32
    %0 = arith.muli %arg0, %c1_i32 : i32
    %1 = arith.addi %0, %arg1 : i32
    %c0_i32 = arith.constant 0 : i32
    %c0_i32_0 = arith.constant 0 : i32
    %c0_i32_1 = arith.constant 0 : i32
    return %1, %c0_i32, %c0_i32_0 : i32, i32, i32
  }
  func.func @transform_2(%arg0: i32, %arg1: i32) -> (i32, i32, i32) {
    %c0_i32 = arith.constant 0 : i32
    %c0_i32_0 = arith.constant 0 : i32
    %c0_i32_1 = arith.constant 0 : i32
    return %arg0, %c0_i32, %c0_i32_0 : i32, i32, i32
  }
  func.func @transform_3(%arg0: i32, %arg1: i32) -> (i32, i32, i32) {
    %c0_i32 = arith.constant 0 : i32
    %c0_i32_0 = arith.constant 0 : i32
    %c0_i32_1 = arith.constant 0 : i32
    return %arg0, %c0_i32, %c0_i32_0 : i32, i32, i32
  }
}

</mosaic_0001>

<llo_original>
// kernel: tpu_custom_call.1
$region0: #{tpu_custom_call.1}
  #allocation0 [shape = 'u32[]', space=smem, size = 0x4, offset = 0x4, fixed_abs, tag = 'smem constant byte address 0x4 - core index']
  #allocation1 [shape = 'u32[72,128]{1,0:T(1,128)}', space=vmem, size = 0x9000, scoped, tag = 'internal scratch']
  %s0 = inlined_call_operand.hbm [shape: f32[8,16,16], index: 0, kind: input, shape index: {}]
  %s1 = inlined_call_operand.hbm [shape: f32[8,16,16], index: 1, kind: input, shape index: {}]
  %s2 = inlined_call_operand.vmem [shape: f32[2,15,16], index: 2, kind: output, shape index: {0}]
  %s3 = inlined_call_operand.vmem [shape: f32[2,16,15], index: 3, kind: output, shape index: {1}]
  %4 = xla_tuple %s2, %s3
  %s5 = sld [smem:[#allocation0]]
  $region61: #{tpu_custom_call.1} parent=0
    _
  %s7 = ssub.s32 1, %s5
  %s8 = scalar_select 0, %s7, %s5
  $region1: #{tpu_custom_call.1} parent=0
    #allocation2 [shape = 'u8[65536]{0}', space=vmem, size = 0x10000, scoped, tag = 'input window, operand 0']
    #allocation3 [shape = 's32[2]{0}', space=sflag, size = 0x8, scoped, tag = 'scoped memory for tpu_custom_call.1']
    #allocation4 [shape = 'u8[65536]{0}', space=vmem, size = 0x10000, scoped, tag = 'input window, operand 1']
    #allocation5 [shape = 's32[2]{0}', space=sflag, size = 0x8, scoped, tag = 'scoped memory for tpu_custom_call.1']
    %9 = vsyncpa [#allocation3], 0
    %s10 = scalar_lea.sflag [#allocation3], 1
    %11 = vsyncpa %s10, 0
    %12 = vsyncpa [#allocation5], 0
    %s13 = scalar_lea.sflag [#allocation5], 1
    %14 = vsyncpa %s13, 0
    loop: start=0, step=1, limit=4
    $region2: #{tpu_custom_call.1} parent=1 // loop_pre_header
      _
    $region3: #{tpu_custom_call.1} parent=1 // loop_header
      %s16 = sphi 0, %s20
      %p17 = scmp.ge.s32.totalorder %s16, 4
      %s23 = sphi 0, %s35
      %s24 = sphi 0, %s31
      %s25 = sphi 0, %s23
      %s26 = sphi 0, %s24
      %s27 = sphi 0, %s25
      %s28 = sphi 0, %s26
      %s40 = sphi 0, %s42
      %s43 = sphi 0, %s40
      %s44 = sphi 0, %s43
      %s60 = sphi 0, %s44
      %s68 = sphi 0, %s70
      %s71 = sphi 0, %s68
      %s72 = sphi 0, %s71
      %s88 = sphi 0, %s72
      %s94 = sphi 0, %s96
      %s97 = sphi 0, %s94
      %s98 = sphi 0, %s97
      %s114 = sphi 0, %s98
      %s120 = sphi 0, %s122
      %s123 = sphi 0, %s120
      %s124 = sphi 0, %s123
      %s140 = sphi 0, %s124
    $region4: #{tpu_custom_call.1} parent=1 // loop_header_branch
      %19 = sbr.rel (%p17) target = $region8
    $region5: #{tpu_custom_call.1} parent=1 // loop_body
      %s21 = ssub.s32 %s16, 1
      %s22 = ssub.s32 %s16, 2
      %s29 = sadd.s32 1, %s24
      %p30 = scmp.ge.s32.totalorder %s29, 1
      %s31 = scalar_select %p30, 0, %s29
      %s32 = sadd.s32 1, %s23
      %s33 = scalar_select %p30, %s32, %s23
      %p34 = scmp.ge.s32.totalorder %s33, 2
      %s35 = scalar_select %p34, 0, %s33
      %s36 = sadd.s32 %s23, %s24
      %s37 = sadd.s32 %s35, %s31
      %s38 = ssub.s32 %s36, %s37
      %p39 = scmp.eq.s32.totalorder %s38, 0
      %s41 = sadd.s32 %s40, 1
      %s42 = scalar_select %p39, %s40, %s41
      %p45 = pneg %p39
      %p46 = scmp.eq.s32.totalorder %s16, 1
      %p47 = por %p45, %p46
      %p48 = scmp.ne.s32.totalorder %s40, %s43
      %p49 = scmp.eq.s32.totalorder %s16, 0
      %p50 = por %p48, %p49
      %p51 = scmp.ne.s32.totalorder %s40, %s43
      %p52 = scmp.eq.s32.totalorder %s21, 1
      %p53 = por %p51, %p52
      %p54 = scmp.ne.s32.totalorder %s43, %s44
      %p55 = scmp.eq.s32.totalorder %s21, 0
      %p56 = por %p54, %p55
      %p57 = scmp.ne.s32.totalorder %s43, %s44
      %p58 = scmp.eq.s32.totalorder %s22, 1
      %p59 = por %p57, %p58
      %p61 = scmp.ne.s32.totalorder %s44, %s60
      %p62 = scmp.eq.s32.totalorder %s22, 0
      %p63 = por %p61, %p62
      %s64 = sadd.s32 %s23, %s24
      %s65 = sadd.s32 %s35, %s31
      %s66 = ssub.s32 %s64, %s65
      %p67 = scmp.eq.s32.totalorder %s66, 0
      %s69 = sadd.s32 %s68, 1
      %s70 = scalar_select %p67, %s68, %s69
      %p73 = pneg %p67
      %p74 = scmp.eq.s32.totalorder %s16, 1
      %p75 = por %p73, %p74
      %p76 = scmp.ne.s32.totalorder %s68, %s71
      %p77 = scmp.eq.s32.totalorder %s16, 0
      %p78 = por %p76, %p77
      %p79 = scmp.ne.s32.totalorder %s68, %s71
      %p80 = scmp.eq.s32.totalorder %s21, 1
      %p81 = por %p79, %p80
      %p82 = scmp.ne.s32.totalorder %s71, %s72
      %p83 = scmp.eq.s32.totalorder %s21, 0
      %p84 = por %p82, %p83
      %p85 = scmp.ne.s32.totalorder %s71, %s72
      %p86 = scmp.eq.s32.totalorder %s22, 1
      %p87 = por %p85, %p86
      %p89 = scmp.ne.s32.totalorder %s72, %s88
      %p90 = scmp.eq.s32.totalorder %s22, 0
      %p91 = por %p89, %p90
      %s92 = ssub.s32 %s23, %s35
      %p93 = scmp.eq.s32.totalorder %s92, 0
      %s95 = sadd.s32 %s94, 1
      %s96 = scalar_select %p93, %s94, %s95
      %p99 = pneg %p93
      %p100 = scmp.eq.s32.totalorder %s16, 1
      %p101 = por %p99, %p100
      %p102 = scmp.ne.s32.totalorder %s94, %s97
      %p103 = scmp.eq.s32.totalorder %s16, 0
      %p104 = por %p102, %p103
      %p105 = scmp.ne.s32.totalorder %s94, %s97
      %p106 = scmp.eq.s32.totalorder %s21, 1
      %p107 = por %p105, %p106
      %p108 = scmp.ne.s32.totalorder %s97, %s98
      %p109 = scmp.eq.s32.totalorder %s21, 0
      %p110 = por %p108, %p109
      %p111 = scmp.ne.s32.totalorder %s97, %s98
      %p112 = scmp.eq.s32.totalorder %s22, 1
      %p113 = por %p111, %p112
      %p115 = scmp.ne.s32.totalorder %s98, %s114
      %p116 = scmp.eq.s32.totalorder %s22, 0
      %p117 = por %p115, %p116
      %s118 = ssub.s32 %s23, %s35
      %p119 = scmp.eq.s32.totalorder %s118, 0
      %s121 = sadd.s32 %s120, 1
      %s122 = scalar_select %p119, %s120, %s121
      %p125 = pneg %p119
      %p126 = scmp.eq.s32.totalorder %s16, 1
      %p127 = por %p125, %p126
      %p128 = scmp.ne.s32.totalorder %s120, %s123
      %p129 = scmp.eq.s32.totalorder %s16, 0
      %p130 = por %p128, %p129
      %p131 = scmp.ne.s32.totalorder %s120, %s123
      %p132 = scmp.eq.s32.totalorder %s21, 1
      %p133 = por %p131, %p132
      %p134 = scmp.ne.s32.totalorder %s123, %s124
      %p135 = scmp.eq.s32.totalorder %s21, 0
      %p136 = por %p134, %p135
      %p137 = scmp.ne.s32.totalorder %s123, %s124
      %p138 = scmp.eq.s32.totalorder %s22, 1
      %p139 = por %p137, %p138
      %p141 = scmp.ne.s32.totalorder %s124, %s140
      %p142 = scmp.eq.s32.totalorder %s22, 0
      %p143 = por %p141, %p142
      %p144 = scmp.le.s32.totalorder 1, %s16
      %p145 = scmp.lt.s32.totalorder %s16, 3
      %p146 = pnand %p144, %p145
      %p147 = pneg %p146
      // Predicated region
      $region9: #{tpu_custom_call.1} parent=5 // pred_check
        _
      $region10: #{tpu_custom_call.1} parent=5 // pred_check_branch
        %149 = sbr.rel (%p146) target = $region12
      $region11: #{tpu_custom_call.1} parent=5 // pred_region
        %s150 = ssub.s32 %s16, 1
      $region12: #{tpu_custom_call.1} parent=5 // pred_fallthru
        _
      %p151 = scmp.lt.s32.totalorder %s16, 2
      // Predicated region
      $region13: #{tpu_custom_call.1} parent=5 // pred_check
        %p152 = pneg %p151
      $region14: #{tpu_custom_call.1} parent=5 // pred_check_branch
        %154 = sbr.rel (%p152) target = $region16
      $region15: #{tpu_custom_call.1} parent=5 // pred_region
        // Predicated region
        $region17: #{tpu_custom_call.1} parent=15 // pred_check
          %p155 = pneg %p50
        $region18: #{tpu_custom_call.1} parent=15 // pred_check_branch
          %157 = sbr.rel (%p155) target = $region20
        $region19: #{tpu_custom_call.1} parent=15 // pred_region
          %s158 = sand.u32 %s40, 1
          %s159 = scalar_lea.sflag [#allocation3], %s158
          %s160 = sand.u32 %s40, 1
          %s161 = smul.addr %s160, 64
          %s162 = scalar_lea.vmem [#allocation2], %s161
          %s163 = sadd.s32 %s23, %s24
          %s164 = smul.u32 4, %s163
          %166 = vsyncadd %s159, 0
          %s167 = smul.addr %s164, 2
          %s168 = smul.addr %s167, 8
          %s169 = scalar_lea.hbm %s0, %s168
          %s170 = sshll.u32 %s169, 4
          %s171 = int_to_ptr.hbm [resolvable:$true] %s170
          %s172 = sshll.u32 %s162, 4
          %s173 = int_to_ptr.vmem [resolvable:$true] %s172
          %178 = dma.hbm_to_vmem [thread:$0]  %s171, 1024, %s173, %s159, 128, 128, 8
        $region20: #{tpu_custom_call.1} parent=15 // pred_fallthru
          _
        // Predicated region
        $region21: #{tpu_custom_call.1} parent=15 // pred_check
          %p179 = pneg %p78
        $region22: #{tpu_custom_call.1} parent=15 // pred_check_branch
          %181 = sbr.rel (%p179) target = $region24
        $region23: #{tpu_custom_call.1} parent=15 // pred_region
          %s182 = sand.u32 %s68, 1
          %s183 = scalar_lea.sflag [#allocation5], %s182
          %s184 = sand.u32 %s68, 1
          %s185 = smul.addr %s184, 64
          %s186 = scalar_lea.vmem [#allocation4], %s185
          %s187 = sadd.s32 %s23, %s24
          %s188 = smul.u32 4, %s187
          %190 = vsyncadd %s183, 0
          %s191 = smul.addr %s188, 2
          %s192 = smul.addr %s191, 8
          %s193 = scalar_lea.hbm %s1, %s192
          %s194 = sshll.u32 %s193, 4
          %s195 = int_to_ptr.hbm [resolvable:$true] %s194
          %s196 = sshll.u32 %s186, 4
          %s197 = int_to_ptr.vmem [resolvable:$true] %s196
          %202 = dma.hbm_to_vmem [thread:$0]  %s195, 1024, %s197, %s183, 128, 128, 8
        $region24: #{tpu_custom_call.1} parent=15 // pred_fallthru
          _
      $region16: #{tpu_custom_call.1} parent=5 // pred_fallthru
        _
      %p203 = scmp.le.s32.totalorder 1, %s16
      %p204 = scmp.lt.s32.totalorder %s16, 3
      %p205 = pnand %p203, %p204
      %p206 = pneg %p205
      // Predicated region
      $region25: #{tpu_custom_call.1} parent=5 // pred_check
        _
      $region26: #{tpu_custom_call.1} parent=5 // pred_check_branch
        %208 = sbr.rel (%p205) target = $region28
      $region27: #{tpu_custom_call.1} parent=5 // pred_region
        %s209 = ssub.s32 %s16, 1
        %s210 = sand.u32 %s43, 1
        %s211 = scalar_lea.sflag [#allocation3], %s210
        %s212 = sand.u32 %s43, 1
        %s213 = smul.addr %s212, 64
        %s214 = scalar_lea.vmem [#allocation2], %s213
        // Predicated region
        $region29: #{tpu_custom_call.1} parent=27 // pred_check
          %p215 = pneg %p56
        $region30: #{tpu_custom_call.1} parent=27 // pred_check_branch
          %217 = sbr.rel (%p215) target = $region32
        $region31: #{tpu_custom_call.1} parent=27 // pred_region
          %219 = dma.done %s211, 1024
        $region32: #{tpu_custom_call.1} parent=27 // pred_fallthru
          _
        %s220 = sand.u32 %s71, 1
        %s221 = scalar_lea.sflag [#allocation5], %s220
        %s222 = sand.u32 %s71, 1
        %s223 = smul.addr %s222, 64
        %s224 = scalar_lea.vmem [#allocation4], %s223
        // Predicated region
        $region33: #{tpu_custom_call.1} parent=27 // pred_check
          %p225 = pneg %p84
        $region34: #{tpu_custom_call.1} parent=27 // pred_check_branch
          %227 = sbr.rel (%p225) target = $region36
        $region35: #{tpu_custom_call.1} parent=27 // pred_region
          %229 = dma.done %s221, 1024
        $region36: #{tpu_custom_call.1} parent=27 // pred_fallthru
          _
        %s230 = sand.u32 %s43, 1
        %s231 = scalar_lea.sflag [#allocation3], %s230
        %s232 = sand.u32 %s43, 1
        %s233 = smul.addr %s232, 64
        %s234 = scalar_lea.vmem [#allocation2], %s233
        %p235 = pneg %p56
        %p236 = pneg %p53
        %s237 = sand.u32 %s71, 1
        %s238 = scalar_lea.sflag [#allocation5], %s237
        %s239 = sand.u32 %s71, 1
        %s240 = smul.addr %s239, 64
        %s241 = scalar_lea.vmem [#allocation4], %s240
        %p242 = pneg %p84
        %p243 = pneg %p81
        %p244 = pneg %p110
        %p245 = pneg %p107
        %p246 = scmp.lt.s32.totalorder %s25, 1
        %s247 = scalar_select %p246, %s25, 1
        %s248 = smul.addr %s247, 2
        %s249 = smul.addr %s248, 8
        %s250 = scalar_lea.vmem %s2, %s249
        %p251 = pneg %p136
        %p252 = pneg %p133
        %p253 = scmp.lt.s32.totalorder %s25, 1
        %s254 = scalar_select %p253, %s25, 1
        %s255 = smul.addr %s254, 2
        %s256 = smul.addr %s255, 8
        %s257 = scalar_lea.vmem %s3, %s256
        %s258 = sadd.s32 %s25, %s26
        %s259 = smul.u32 4, %s258
        %s260 = sadd.s32 %s25, %s26
        %s261 = smul.u32 4, %s260
        %p262 = scmp.lt.s32.totalorder %s25, 1
        %s263 = scalar_select %p262, %s25, 1
        %s264 = smul.addr %s263, 2
        %s265 = smul.addr %s264, 8
        %s266 = scalar_lea.vmem %s2, %s265
        %p267 = scmp.lt.s32.totalorder %s25, 1
        %s268 = scalar_select %p267, %s25, 1
        %s269 = smul.addr %s268, 2
        %s270 = smul.addr %s269, 8
        %s271 = scalar_lea.vmem %s3, %s270
        %p272 = scmp.eq.s32.totalorder %s26, 0
        // Predicated region
        $region37: #{tpu_custom_call.1} parent=27 // pred_check
          %p273 = pneg %p272
        $region38: #{tpu_custom_call.1} parent=27 // pred_check_branch
          %275 = sbr.rel (%p273) target = $region40
        $region39: #{tpu_custom_call.1} parent=27 // pred_region
          %vm276 = vcmask 130048
          %277 = vst.msk [vmem:[%s266] sm:$0xff] %vm276, 0.0
          %vm278 = vcmask 129024
          %279 = vst.msk [vmem:[%s266 + $0x8] sm:$0x7f] %vm278, 0.0
          %vm280 = vcmask 121856
          %281 = vst.msk [vmem:[%s271] sm:$0xff] %vm280, 0.0
          %282 = vst.msk [vmem:[%s271 + $0x8] sm:$0xff] %vm280, 0.0
        $region40: #{tpu_custom_call.1} parent=27 // pred_fallthru
          _
        %v283 = vld [vmem:[%s214] sm:$0xff]
        %v284 = vld [vmem:[%s214 + $0x8] sm:$0xff]
        %v285 = vld [vmem:[%s214 + $0x10] sm:$0xff]
        %v286 = vld [vmem:[%s214 + $0x18] sm:$0xff]
        %v287 = vld [vmem:[%s214 + $0x20] sm:$0xff]
        %v288 = vld [vmem:[%s214 + $0x28] sm:$0xff]
        %v289 = vld [vmem:[%s214 + $0x30] sm:$0xff]
        %v290 = vld [vmem:[%s214 + $0x38] sm:$0xff]
        %v291 = vld [vmem:[%s224] sm:$0xff]
        %v292 = vld [vmem:[%s224 + $0x8] sm:$0xff]
        %v293 = vld [vmem:[%s224 + $0x10] sm:$0xff]
        %v294 = vld [vmem:[%s224 + $0x18] sm:$0xff]
        %v295 = vld [vmem:[%s224 + $0x20] sm:$0xff]
        %v296 = vld [vmem:[%s224 + $0x28] sm:$0xff]
        %v297 = vld [vmem:[%s224 + $0x30] sm:$0xff]
        %v298 = vld [vmem:[%s224 + $0x38] sm:$0xff]
        %v299 = vsub.f32 %v283, %v291
        %v300 = vsub.f32 %v284, %v292
        %v301 = vsub.f32 %v285, %v293
        %v302 = vsub.f32 %v286, %v294
        %v303 = vsub.f32 %v287, %v295
        %v304 = vsub.f32 %v288, %v296
        %v305 = vsub.f32 %v289, %v297
        %v306 = vsub.f32 %v290, %v298
        %vm315 = vcmask 1040384
        %v316 = vrot.slane %v299, 7
        %v317 = vrot.slane %v300, 7
        %v318 = vsel %vm315, %v316, %v317
        %v319 = vrot.slane %v301, 7
        %v320 = vrot.slane %v302, 7
        %v321 = vsel %vm315, %v319, %v320
        %v322 = vrot.slane %v303, 7
        %v323 = vrot.slane %v304, 7
        %v324 = vsel %vm315, %v322, %v323
        %v325 = vrot.slane %v305, 7
        %v326 = vrot.slane %v306, 7
        %v327 = vsel %vm315, %v325, %v326
        %v336 = vsub.f32 %v299, %v316
        %v337 = vsub.f32 %v300, %v318
        %v338 = vsub.f32 %v301, %v319
        %v339 = vsub.f32 %v302, %v321
        %v340 = vsub.f32 %v303, %v322
        %v341 = vsub.f32 %v304, %v324
        %v342 = vsub.f32 %v305, %v325
        %v343 = vsub.f32 %v306, %v327
        %344 = vrot.lane.b32.xlu0 %v299, 1
        %v345 = vpop.permute.xlu0 %344
        %346 = vrot.lane.b32.xlu0 %v300, 1
        %v347 = vpop.permute.xlu0 %346
        %348 = vrot.lane.b32.xlu0 %v301, 1
        %v349 = vpop.permute.xlu0 %348
        %350 = vrot.lane.b32.xlu0 %v302, 1
        %v351 = vpop.permute.xlu0 %350
        %352 = vrot.lane.b32.xlu0 %v303, 1
        %v353 = vpop.permute.xlu0 %352
        %354 = vrot.lane.b32.xlu0 %v304, 1
        %v355 = vpop.permute.xlu0 %354
        %356 = vrot.lane.b32.xlu0 %v305, 1
        %v357 = vpop.permute.xlu0 %356
        %358 = vrot.lane.b32.xlu0 %v306, 1
        %v359 = vpop.permute.xlu0 %358
        %v368 = vsub.f32 %v299, %v345
        %v369 = vsub.f32 %v300, %v347
        %v370 = vsub.f32 %v301, %v349
        %v371 = vsub.f32 %v302, %v351
        %v372 = vsub.f32 %v303, %v353
        %v373 = vsub.f32 %v304, %v355
        %v374 = vsub.f32 %v305, %v357
        %v375 = vsub.f32 %v306, %v359
        %v376 = vld [vmem:[%s266] sm:$0xff]
        %v377 = vld [vmem:[%s266 + $0x8] sm:$0x7f]
        %v378 = vand.u32 2147483647, %v336
        %v379 = vand.u32 2147483647, %v337
        %v380 = vand.u32 2147483647, %v338
        %v381 = vand.u32 2147483647, %v339
        %v382 = vand.u32 2147483647, %v340
        %v383 = vand.u32 2147483647, %v341
        %v384 = vand.u32 2147483647, %v342
        %v385 = vand.u32 2147483647, %v343
        %vm386 = vcmask 130049
        %v387 = vsel %vm386, %v378, 0.0
        %v388 = vsel %vm386, %v380, 0.0
        %v389 = vadd.f32 %v387, %v388
        %v390 = vsel %vm386, %v382, 0.0
        %v391 = vadd.f32 %v389, %v390
        %v392 = vsel %vm386, %v384, 0.0
        %v393 = vadd.f32 %v391, %v392
        %vm394 = vcmask 130048
        %v395 = vsel %vm394, %v379, 0.0
        %v396 = vsel %vm394, %v381, 0.0
        %v397 = vadd.f32 %v395, %v396
        %v398 = vsel %vm394, %v383, 0.0
        %v399 = vadd.f32 %v397, %v398
        %v400 = vsel %vm394, %v385, 0.0
        %v401 = vadd.f32 %v399, %v400
        %vm404 = vcmask 1046528
        %v405 = vrot.slane %v393, 1
        %v406 = vrot.slane %v401, 1
        %v407 = vsel %vm404, %v405, %v406
        %v410 = vadd.f32 %v376, %v407
        %v411 = vadd.f32 %v377, %v406
        %412 = vst.msk [vmem:[%s266] sm:$0xff] %vm394, %v410
        %vm413 = vcmask 129024
        %414 = vst.msk [vmem:[%s266 + $0x8] sm:$0x7f] %vm413, %v411
        %v415 = vld [vmem:[%s271] sm:$0xff]
        %v416 = vld [vmem:[%s271 + $0x8] sm:$0xff]
        %v417 = vand.u32 2147483647, %v368
        %v418 = vand.u32 2147483647, %v369
        %v419 = vand.u32 2147483647, %v370
        %v420 = vand.u32 2147483647, %v371
        %v421 = vand.u32 2147483647, %v372
        %v422 = vand.u32 2147483647, %v373
        %v423 = vand.u32 2147483647, %v374
        %v424 = vand.u32 2147483647, %v375
        %vm425 = vcmask 130056
        %v426 = vsel %vm425, %v417, 0.0
        %v427 = vsel %vm425, %v419, 0.0
        %v428 = vadd.f32 %v426, %v427
        %v429 = vsel %vm425, %v421, 0.0
        %v430 = vadd.f32 %v428, %v429
        %v431 = vsel %vm425, %v423, 0.0
        %v432 = vadd.f32 %v430, %v431
        %v433 = vsel %vm425, %v418, 0.0
        %v434 = vsel %vm425, %v420, 0.0
        %v435 = vadd.f32 %v433, %v434
        %v436 = vsel %vm425, %v422, 0.0
        %v437 = vadd.f32 %v435, %v436
        %v438 = vsel %vm425, %v424, 0.0
        %v439 = vadd.f32 %v437, %v438
        %442 = vrot.lane.b32.xlu0 %v432, 127
        %v443 = vpop.permute.xlu0 %442
        %444 = vrot.lane.b32.xlu0 %v439, 127
        %v445 = vpop.permute.xlu0 %444
        %v448 = vadd.f32 %v415, %v443
        %v449 = vadd.f32 %v416, %v445
        %vm450 = vcmask 121856
        %451 = vst.msk [vmem:[%s271] sm:$0xff] %vm450, %v448
        %452 = vst.msk [vmem:[%s271 + $0x8] sm:$0xff] %vm450, %v449
        %p453 = scmp.lt.s32.totalorder %s25, 1
        %s454 = scalar_select %p453, %s25, 1
        %s455 = smul.addr %s454, 2
        %s456 = smul.addr %s455, 8
        %s457 = scalar_lea.vmem %s2, %s456
        %p458 = scmp.lt.s32.totalorder %s25, 1
        %s459 = scalar_select %p458, %s25, 1
        %s460 = smul.addr %s459, 2
        %s461 = smul.addr %s460, 8
        %s462 = scalar_lea.vmem %s3, %s461
        // Predicated region
        $region41: #{tpu_custom_call.1} parent=27 // pred_check
          %p463 = pneg %p107
        $region42: #{tpu_custom_call.1} parent=27 // pred_check_branch
          %465 = sbr.rel (%p463) target = $region44
        $region43: #{tpu_custom_call.1} parent=27 // pred_region
          _
        $region44: #{tpu_custom_call.1} parent=27 // pred_fallthru
          _
        // Predicated region
        $region45: #{tpu_custom_call.1} parent=27 // pred_check
          %p466 = pneg %p133
        $region46: #{tpu_custom_call.1} parent=27 // pred_check_branch
          %468 = sbr.rel (%p466) target = $region48
        $region47: #{tpu_custom_call.1} parent=27 // pred_region
          _
        $region48: #{tpu_custom_call.1} parent=27 // pred_fallthru
          _
      $region28: #{tpu_custom_call.1} parent=5 // pred_fallthru
        _
      %p469 = scmp.le.s32.totalorder 2, %s16
      // Predicated region
      $region49: #{tpu_custom_call.1} parent=5 // pred_check
        %p470 = pneg %p469
      $region50: #{tpu_custom_call.1} parent=5 // pred_check_branch
        %472 = sbr.rel (%p470) target = $region52
      $region51: #{tpu_custom_call.1} parent=5 // pred_region
        %s473 = ssub.s32 %s16, 2
        // Predicated region
        $region53: #{tpu_custom_call.1} parent=51 // pred_check
          %p474 = pneg %p113
        $region54: #{tpu_custom_call.1} parent=51 // pred_check_branch
          %476 = sbr.rel (%p474) target = $region56
        $region55: #{tpu_custom_call.1} parent=51 // pred_region
          %p477 = scmp.lt.s32.totalorder %s27, 1
          %s478 = scalar_select %p477, %s27, 1
          %s479 = smul.addr %s478, 2
          %s480 = smul.addr %s479, 8
          %s481 = scalar_lea.vmem %s2, %s480
        $region56: #{tpu_custom_call.1} parent=51 // pred_fallthru
          _
        // Predicated region
        $region57: #{tpu_custom_call.1} parent=51 // pred_check
          %p482 = pneg %p139
        $region58: #{tpu_custom_call.1} parent=51 // pred_check_branch
          %484 = sbr.rel (%p482) target = $region60
        $region59: #{tpu_custom_call.1} parent=51 // pred_region
          %p485 = scmp.lt.s32.totalorder %s27, 1
          %s486 = scalar_select %p485, %s27, 1
          %s487 = smul.addr %s486, 2
          %s488 = smul.addr %s487, 8
          %s489 = scalar_lea.vmem %s3, %s488
        $region60: #{tpu_custom_call.1} parent=51 // pred_fallthru
          _
      $region52: #{tpu_custom_call.1} parent=5 // pred_fallthru
        _
    $region6: #{tpu_custom_call.1} parent=1 // loop_footer
      %s20 = sadd.s32 1, %s16
    $region7: #{tpu_custom_call.1} parent=1 // loop_footer_branch
      %15 = sbr.rel target = $region3
    $region8: #{tpu_custom_call.1} parent=1 // loop_exit
      _
    %490 = vsyncpa [#allocation3], 1
    %s491 = scalar_lea.sflag [#allocation3], 1
    %492 = vsyncpa %s491, 1
    %493 = vsyncpa [#allocation5], 1
    %s494 = scalar_lea.sflag [#allocation5], 1
    %495 = vsyncpa %s494, 1

</llo_original>
